<compile_context>
chip_gen: v7x
topology: tpu7x:2x2x1
jax: 0.10.0
libtpu: 0.0.40
codegen_flags: <defaults>
</compile_context>

<pallas_src>
import functools

import jax
import jax.numpy as jnp
from jax import lax
from jax.experimental import pallas as pl
from jax.experimental.pallas import tpu as pltpu

_LANE = 128                      # lane width: last dims padded to multiples of this
_SUBLANE = 16                    # sublane granularity safe for bf16-packed tiles
_BN_EPS = 1e-5
_NEG_INF = -1e30                 # finite "-inf" bias for padded logit columns
_MATMUL_DTYPE = jnp.bfloat16     # MXU input dtype (f32 accumulation everywhere)
_VMEM_LIMIT = 32 * 1024 * 1024


def _round_up(x, m):
    return (x + m - 1) // m * m


def _choose_tile(b, dp, hp, cp, tile_batch=None):
    """Batch tile size: largest multiple of 16 keeping double-buffered tiles plus
    in-kernel intermediates within ~8 MiB (comfortable on 64-128 MiB VMEM parts)."""
    if tile_batch is not None:
        tb = max(_SUBLANE, _round_up(min(int(tile_batch), _round_up(b, _SUBLANE)),
                                     _SUBLANE))
        return tb, pl.cdiv(b, tb)
    budget = 8 * 1024 * 1024
    # x(bf16, 2-buf) + h/a intermediates (f32) + out(f32, 2-buf), per batch row.
    per_row = 4 * dp + 14 * hp + 8 * cp
    cap = max(_SUBLANE, min(1024, (budget // per_row) // _SUBLANE * _SUBLANE))
    num_tiles = pl.cdiv(b, cap)
    tb = _round_up(pl.cdiv(b, num_tiles), _SUBLANE)
    return tb, num_tiles


# -----------------------------------------------------------------------------
# Sweep 1: fc1 per batch tile -> accumulate global sum(h), sum(h*h) per feature
# -----------------------------------------------------------------------------
def _fc1_stats_kernel(x_ref, w1_ref, b1_ref, stats_ref, *, tb, b_real):
    i = pl.program_id(0)

    @pl.when(i == 0)
    def _():
        stats_ref[...] = jnp.zeros_like(stats_ref)

    h = jnp.dot(x_ref[...], w1_ref[...],
                preferred_element_type=jnp.float32) + b1_ref[...]      # [TB, Hp] f32

    # Mask padded batch rows out of the batch statistics.
    row = i * tb + lax.broadcasted_iota(jnp.int32, (tb, 1), 0)
    hm = jnp.where(row < b_real, h, 0.0)
    s = jnp.sum(hm, axis=0, keepdims=True)                              # [1, Hp]
    s2 = jnp.sum(hm * hm, axis=0, keepdims=True)                        # [1, Hp]
    stats_ref[...] += jnp.concatenate([s, s2], axis=0)                  # [2, Hp]


# -----------------------------------------------------------------------------
# Sweep 2: fc1 (recompute) -> BN (scale/shift) -> ReLU -> fc2 -> log_softmax
# -----------------------------------------------------------------------------
def _fused_fwd_kernel(x_ref, w1_ref, b1_ref, scale_ref, shift_ref,
                      w2_ref, b2_ref, o_ref):
    h = jnp.dot(x_ref[...], w1_ref[...],
                preferred_element_type=jnp.float32) + b1_ref[...]       # [TB, Hp] f32
    a = jnp.maximum(h * scale_ref[...] + shift_ref[...], 0.0)           # BN + ReLU
    logits = jnp.dot(a.astype(_MATMUL_DTYPE), w2_ref[...],
                     preferred_element_type=jnp.float32) + b2_ref[...]  # [TB, Cp] f32
    m = jnp.max(logits, axis=1, keepdims=True)
    z = logits - m
    lse = jnp.log(jnp.sum(jnp.exp(z), axis=1, keepdims=True))
    o_ref[...] = z - lse


@functools.partial(jax.jit, static_argnames=("tile_batch",))
def domain_classifier_forward(x, params, *, tile_batch=None):
    """x: [B, input_size] float32. Returns [B, num_classes] log-probs,
    or [num_classes] if B == 1 (matching the PyTorch forward)."""
    w1, b1 = params["w1"], params["b1"]
    gamma, beta = params["gamma"], params["beta"]
    w2, b2 = params["w2"], params["b2"]

    B, D = x.shape
    H = w1.shape[1]
    C = w2.shape[1]

    if B == 1:
        # PyTorch path: fc1(x).repeat(2,1) -> BN(train) over two identical rows
        # collapses exactly to `beta` -> relu -> fc2 -> log_softmax, row 0.
        logits = jnp.maximum(beta, 0.0) @ w2 + b2
        z = logits - jnp.max(logits)
        return z - jnp.log(jnp.sum(jnp.exp(z)))

    Dp = _round_up(D, _LANE)
    Hp = _round_up(H, _LANE)
    Cp = _round_up(C, _LANE)
    TB, num_tiles = _choose_tile(B, Dp, Hp, Cp, tile_batch)
    Bp = TB * num_tiles

    f32 = jnp.float32
    xp = jnp.zeros((Bp, Dp), _MATMUL_DTYPE).at[:B, :D].set(x.astype(_MATMUL_DTYPE))
    w1p = jnp.zeros((Dp, Hp), _MATMUL_DTYPE).at[:D, :H].set(w1.astype(_MATMUL_DTYPE))
    b1p = jnp.zeros((1, Hp), f32).at[0, :H].set(b1.astype(f32))
    gammap = jnp.ones((Hp,), f32).at[:H].set(gamma.astype(f32))
    betap = jnp.zeros((Hp,), f32).at[:H].set(beta.astype(f32))
    w2p = jnp.zeros((Hp, Cp), _MATMUL_DTYPE).at[:H, :C].set(w2.astype(_MATMUL_DTYPE))
    b2p = jnp.full((1, Cp), _NEG_INF, f32).at[0, :C].set(b2.astype(f32))

    # ---- Sweep 1: fc1 + global batch statistics (no h written to HBM) --------
    stats = pl.pallas_call(
        functools.partial(_fc1_stats_kernel, tb=TB, b_real=B),
        grid=(num_tiles,),
        in_specs=[
            pl.BlockSpec((TB, Dp), lambda i: (i, 0)),   # x tile
            pl.BlockSpec((Dp, Hp), lambda i: (0, 0)),   # w1 (resident)
            pl.BlockSpec((1, Hp), lambda i: (0, 0)),    # b1 (resident)
        ],
        out_specs=pl.BlockSpec((2, Hp), lambda i: (0, 0)),   # [sum; sumsq] accumulator
        out_shape=jax.ShapeDtypeStruct((2, Hp), f32),
        compiler_params=pltpu.CompilerParams(
            dimension_semantics=("arbitrary",),         # reduction into stats
            vmem_limit_bytes=_VMEM_LIMIT,
        ),
    )(xp, w1p, b1p)

    # ---- Tiny [Hp] epilogue: batch mean / biased var -> BN scale & shift ------
    mean = stats[0] / B
    var = jnp.maximum(stats[1] / B - mean * mean, 0.0)
    scale = (gammap * lax.rsqrt(var + _BN_EPS)).reshape(1, Hp)
    shift = (betap - mean * scale[0]).reshape(1, Hp)

    # ---- Sweep 2: fc1 (recompute) -> BN -> ReLU -> fc2 -> log_softmax ---------
    out = pl.pallas_call(
        _fused_fwd_kernel,
        grid=(num_tiles,),
        in_specs=[
            pl.BlockSpec((TB, Dp), lambda i: (i, 0)),   # x tile (reused, bf16)
            pl.BlockSpec((Dp, Hp), lambda i: (0, 0)),   # w1 (resident)
            pl.BlockSpec((1, Hp), lambda i: (0, 0)),    # b1 (resident)
            pl.BlockSpec((1, Hp), lambda i: (0, 0)),    # BN scale
            pl.BlockSpec((1, Hp), lambda i: (0, 0)),    # BN shift
            pl.BlockSpec((Hp, Cp), lambda i: (0, 0)),   # w2 (resident)
            pl.BlockSpec((1, Cp), lambda i: (0, 0)),    # b2 (padded cols = -1e30)
        ],
        out_specs=pl.BlockSpec((TB, Cp), lambda i: (i, 0)),
        out_shape=jax.ShapeDtypeStruct((Bp, Cp), f32),
        compiler_params=pltpu.CompilerParams(
            dimension_semantics=("parallel",),          # megacore on v7x
            vmem_limit_bytes=_VMEM_LIMIT,
        ),
    )(xp, w1p, b1p, scale, shift, w2p, b2p)

    return out[:B, :C]


def init_params(key, input_size, hidden_size, num_classes):
    """Deterministic synthetic init (shapes match nn.Linear / nn.BatchNorm1d,
    weights stored as [in_features, out_features])."""
    k1, k2, k3, k4 = jax.random.split(key, 4)
    w1 = (jax.random.normal(k1, (input_size, hidden_size), jnp.float32)
          / jnp.sqrt(input_size))
    b1 = jax.random.normal(k2, (hidden_size,), jnp.float32) * 0.01
    w2 = (jax.random.normal(k3, (hidden_size, num_classes), jnp.float32)
          / jnp.sqrt(hidden_size))
    b2 = jax.random.normal(k4, (num_classes,), jnp.float32) * 0.01
    gamma = jnp.ones((hidden_size,), jnp.float32)   # bn1.weight init
    beta = jnp.zeros((hidden_size,), jnp.float32)   # bn1.bias init
    return {"w1": w1, "b1": b1, "gamma": gamma, "beta": beta,
            "w2": w2, "b2": b2}


def _reference(x, params):
    """Pure-JAX reference using the same matmul dtype / BN formulation."""
    mm = _MATMUL_DTYPE
    h = jnp.dot(x.astype(mm), params["w1"].astype(mm),
                preferred_element_type=jnp.float32) + params["b1"]
    mean = jnp.mean(h, axis=0, keepdims=True)
    var = jnp.maximum(jnp.mean(h * h, axis=0, keepdims=True) - mean * mean, 0.0)
    hn = (h - mean) * lax.rsqrt(var + _BN_EPS) * params["gamma"] + params["beta"]
    a = jnp.maximum(hn, 0.0)
    logits = jnp.dot(a.astype(mm), params["w2"].astype(mm),
                     preferred_element_type=jnp.float32) + params["b2"]
    z = logits - jnp.max(logits, axis=1, keepdims=True)
    return z - jnp.log(jnp.sum(jnp.exp(z), axis=1, keepdims=True))


if __name__ == "__main__":
    key = jax.random.PRNGKey(0)
    kx, kp, kx2 = jax.random.split(key, 3)

    batch, input_size, hidden_size, num_classes = 2, 32, 32, 8
    x = jax.random.normal(kx, (batch, input_size), jnp.float32)
    params = init_params(kp, input_size, hidden_size, num_classes)

    out = domain_classifier_forward(x, params)
    jax.block_until_ready(out)
    assert out.shape == (batch, num_classes)
    ref = _reference(x, params)
    assert jnp.allclose(out, ref, atol=2e-2, rtol=2e-2), (out, ref)

    # Multi-tile path: forces 3 batch tiles so cross-tile BN statistics are exercised.
    xb = jax.random.normal(kx2, (48, input_size), jnp.float32)
    outb = domain_classifier_forward(xb, params, tile_batch=16)
    jax.block_until_ready(outb)
    refb = _reference(xb, params)
    assert outb.shape == (48, num_classes)
    assert jnp.allclose(outb, refb, atol=2e-2, rtol=2e-2)

    # Exercise the B == 1 branch (repeat(2,1) -> BN -> ... -> row 0).
    out1 = domain_classifier_forward(x[:1], params)
    jax.block_until_ready(out1)
    assert out1.shape == (num_classes,)

    print("KERNEL_OK")
</pallas_src>

<mosaic_0001>
module attributes {stable_mosaic.version = 11 : i64} {
  func.func @_fused_fwd_kernel(%arg0: i32, %arg1: memref<16x128xbf16, #tpu.memory_space<vmem>>, %arg2: memref<128x128xbf16, #tpu.memory_space<vmem>>, %arg3: memref<1x128xf32, #tpu.memory_space<vmem>>, %arg4: memref<1x128xf32, #tpu.memory_space<vmem>>, %arg5: memref<1x128xf32, #tpu.memory_space<vmem>>, %arg6: memref<128x128xbf16, #tpu.memory_space<vmem>>, %arg7: memref<1x128xf32, #tpu.memory_space<vmem>>, %arg8: memref<16x128xf32, #tpu.memory_space<vmem>>) attributes {dimension_semantics = [#tpu.dimension_semantics<parallel>], iteration_bounds = array<i64: 1>, scalar_prefetch = 0 : i64, scratch_operands = 0 : i64, tpu.core_type = #tpu.core_type<tc>, window_params = [{transform_indices = @transform_0, window_bounds = array<i64: 16, 128>}, {pipeline_mode = #tpu.pipeline_mode<synchronous>, transform_indices = @transform_1, window_bounds = array<i64: 128, 128>}, {pipeline_mode = #tpu.pipeline_mode<synchronous>, transform_indices = @transform_2, window_bounds = array<i64: 1, 128>}, {pipeline_mode = #tpu.pipeline_mode<synchronous>, transform_indices = @transform_3, window_bounds = array<i64: 1, 128>}, {pipeline_mode = #tpu.pipeline_mode<synchronous>, transform_indices = @transform_4, window_bounds = array<i64: 1, 128>}, {pipeline_mode = #tpu.pipeline_mode<synchronous>, transform_indices = @transform_5, window_bounds = array<i64: 128, 128>}, {pipeline_mode = #tpu.pipeline_mode<synchronous>, transform_indices = @transform_6, window_bounds = array<i64: 1, 128>}, {transform_indices = @transform_7, window_bounds = array<i64: 16, 128>}]} {
    %c0 = arith.constant 0 : index
    %c0_0 = arith.constant 0 : index
    %0 = vector.load %arg1[%c0, %c0_0] : memref<16x128xbf16, #tpu.memory_space<vmem>>, vector<16x128xbf16>
    %c0_1 = arith.constant 0 : index
    %c0_2 = arith.constant 0 : index
    %1 = vector.load %arg2[%c0_1, %c0_2] : memref<128x128xbf16, #tpu.memory_space<vmem>>, vector<128x128xbf16>
    %cst = arith.constant dense<0.000000e+00> : vector<16x128xf32>
    %2 = tpu.matmul %0, %1, %cst {dimension_numbers = #tpu.dot_dimension_numbers<[1], [0], [0], [1], [0, 0, 1, 1], [], []>} : vector<16x128xbf16>, vector<128x128xbf16>, vector<16x128xf32> -> vector<16x128xf32>
    %c0_3 = arith.constant 0 : index
    %c0_4 = arith.constant 0 : index
    %3 = vector.load %arg3[%c0_3, %c0_4] : memref<1x128xf32, #tpu.memory_space<vmem>>, vector<1x128xf32>
    %4 = vector.broadcast %3 : vector<1x128xf32> to vector<16x128xf32>
    %5 = arith.addf %2, %4 : vector<16x128xf32>
    %c0_5 = arith.constant 0 : index
    %c0_6 = arith.constant 0 : index
    %6 = vector.load %arg4[%c0_5, %c0_6] : memref<1x128xf32, #tpu.memory_space<vmem>>, vector<1x128xf32>
    %7 = vector.broadcast %6 : vector<1x128xf32> to vector<16x128xf32>
    %8 = arith.mulf %5, %7 : vector<16x128xf32>
    %c0_7 = arith.constant 0 : index
    %c0_8 = arith.constant 0 : index
    %9 = vector.load %arg5[%c0_7, %c0_8] : memref<1x128xf32, #tpu.memory_space<vmem>>, vector<1x128xf32>
    %10 = vector.broadcast %9 : vector<1x128xf32> to vector<16x128xf32>
    %11 = arith.addf %8, %10 : vector<16x128xf32>
    %cst_9 = arith.constant 0.000000e+00 : f32
    %12 = vector.broadcast %cst_9 : f32 to vector<16x128xf32>
    %13 = arith.maximumf %11, %12 : vector<16x128xf32>
    %14 = arith.truncf %13 : vector<16x128xf32> to vector<16x128xbf16>
    %c0_10 = arith.constant 0 : index
    %c0_11 = arith.constant 0 : index
    %15 = vector.load %arg6[%c0_10, %c0_11] : memref<128x128xbf16, #tpu.memory_space<vmem>>, vector<128x128xbf16>
    %cst_12 = arith.constant dense<0.000000e+00> : vector<16x128xf32>
    %16 = tpu.matmul %14, %15, %cst_12 {dimension_numbers = #tpu.dot_dimension_numbers<[1], [0], [0], [1], [0, 0, 1, 1], [], []>} : vector<16x128xbf16>, vector<128x128xbf16>, vector<16x128xf32> -> vector<16x128xf32>
    %c0_13 = arith.constant 0 : index
    %c0_14 = arith.constant 0 : index
    %17 = vector.load %arg7[%c0_13, %c0_14] : memref<1x128xf32, #tpu.memory_space<vmem>>, vector<1x128xf32>
    %18 = vector.broadcast %17 : vector<1x128xf32> to vector<16x128xf32>
    %19 = arith.addf %16, %18 : vector<16x128xf32>
    %cst_15 = arith.constant dense<0xFF800000> : vector<16xf32>
    %20 = vector.multi_reduction <maximumf>, %19, %cst_15 [1] : vector<16x128xf32> to vector<16xf32>
    %21 = vector.shape_cast %20 : vector<16xf32> to vector<16x1xf32>
    %22 = vector.broadcast %21 : vector<16x1xf32> to vector<16x128xf32>
    %23 = arith.subf %19, %22 : vector<16x128xf32>
    %24 = math.exp %23 : vector<16x128xf32>
    %cst_16 = arith.constant dense<0.000000e+00> : vector<16xf32>
    %25 = vector.multi_reduction <add>, %24, %cst_16 [1] : vector<16x128xf32> to vector<16xf32>
    %26 = vector.shape_cast %25 : vector<16xf32> to vector<16x1xf32>
    %27 = math.log %26 : vector<16x1xf32>
    %28 = vector.broadcast %27 : vector<16x1xf32> to vector<16x128xf32>
    %29 = arith.subf %23, %28 : vector<16x128xf32>
    %c0_17 = arith.constant 0 : index
    %c0_18 = arith.constant 0 : index
    %30 = vector.load %arg8[%c0_17, %c0_18] : memref<16x128xf32, #tpu.memory_space<vmem>>, vector<16x128xf32>
    tpu.vector_store %arg8[%c0_17, %c0_18], %29 {strides = array<i32>} : memref<16x128xf32, #tpu.memory_space<vmem>>, vector<16x128xf32>,
    return
  }
  func.func @transform_0(%arg0: i32) -> (i32, i32) {
    %c0_i32 = arith.constant 0 : i32
    %c0_i32_0 = arith.constant 0 : i32
    return %arg0, %c0_i32 : i32, i32
  }
  func.func @transform_1(%arg0: i32) -> (i32, i32) {
    %c0_i32 = arith.constant 0 : i32
    %c0_i32_0 = arith.constant 0 : i32
    %c0_i32_1 = arith.constant 0 : i32
    return %c0_i32, %c0_i32_0 : i32, i32
  }
  func.func @transform_2(%arg0: i32) -> (i32, i32) {
    %c0_i32 = arith.constant 0 : i32
    %c0_i32_0 = arith.constant 0 : i32
    %c0_i32_1 = arith.constant 0 : i32
    return %c0_i32, %c0_i32_0 : i32, i32
  }
  func.func @transform_3(%arg0: i32) -> (i32, i32) {
    %c0_i32 = arith.constant 0 : i32
    %c0_i32_0 = arith.constant 0 : i32
    %c0_i32_1 = arith.constant 0 : i32
    return %c0_i32, %c0_i32_0 : i32, i32
  }
  func.func @transform_4(%arg0: i32) -> (i32, i32) {
    %c0_i32 = arith.constant 0 : i32
    %c0_i32_0 = arith.constant 0 : i32
    %c0_i32_1 = arith.constant 0 : i32
    return %c0_i32, %c0_i32_0 : i32, i32
  }
  func.func @transform_5(%arg0: i32) -> (i32, i32) {
    %c0_i32 = arith.constant 0 : i32
    %c0_i32_0 = arith.constant 0 : i32
    %c0_i32_1 = arith.constant 0 : i32
    return %c0_i32, %c0_i32_0 : i32, i32
  }
  func.func @transform_6(%arg0: i32) -> (i32, i32) {
    %c0_i32 = arith.constant 0 : i32
    %c0_i32_0 = arith.constant 0 : i32
    %c0_i32_1 = arith.constant 0 : i32
    return %c0_i32, %c0_i32_0 : i32, i32
  }
  func.func @transform_7(%arg0: i32) -> (i32, i32) {
    %c0_i32 = arith.constant 0 : i32
    %c0_i32_0 = arith.constant 0 : i32
    return %arg0, %c0_i32 : i32, i32
  }
}

module attributes {stable_mosaic.version = 11 : i64} {
  func.func @_fc1_stats_kernel(%arg0: i32, %arg1: memref<16x128xbf16, #tpu.memory_space<vmem>>, %arg2: memref<128x128xbf16, #tpu.memory_space<vmem>>, %arg3: memref<1x128xf32, #tpu.memory_space<vmem>>, %arg4: memref<2x128xf32, #tpu.memory_space<vmem>>) attributes {dimension_semantics = [#tpu.dimension_semantics<arbitrary>], iteration_bounds = array<i64: 1>, scalar_prefetch = 0 : i64, scratch_operands = 0 : i64, tpu.core_type = #tpu.core_type<tc>, window_params = [{transform_indices = @transform_0, window_bounds = array<i64: 16, 128>}, {pipeline_mode = #tpu.pipeline_mode<synchronous>, transform_indices = @transform_1, window_bounds = array<i64: 128, 128>}, {pipeline_mode = #tpu.pipeline_mode<synchronous>, transform_indices = @transform_2, window_bounds = array<i64: 1, 128>}, {pipeline_mode = #tpu.pipeline_mode<synchronous>, transform_indices = @transform_3, window_bounds = array<i64: 2, 128>}]} {
    %c0_i32 = arith.constant 0 : i32
    %0 = arith.cmpi eq, %arg0, %c0_i32 : i32
    %1 = arith.extui %0 : i1 to i32
    %c0_i32_0 = arith.constant 0 : i32
    %2 = arith.cmpi ne, %1, %c0_i32_0 : i32
    scf.if %2 {
      %cst_13 = arith.constant 0.000000e+00 : f32
      %28 = vector.broadcast %cst_13 : f32 to vector<2x128xf32>
      %c0_14 = arith.constant 0 : index
      %c0_15 = arith.constant 0 : index
      %29 = vector.load %arg4[%c0_14, %c0_15] : memref<2x128xf32, #tpu.memory_space<vmem>>, vector<2x128xf32>
      tpu.vector_store %arg4[%c0_14, %c0_15], %28 {strides = array<i32>} : memref<2x128xf32, #tpu.memory_space<vmem>>, vector<2x128xf32>,
    } else {
    }
    %c0 = arith.constant 0 : index
    %c0_1 = arith.constant 0 : index
    %3 = vector.load %arg1[%c0, %c0_1] : memref<16x128xbf16, #tpu.memory_space<vmem>>, vector<16x128xbf16>
    %c0_2 = arith.constant 0 : index
    %c0_3 = arith.constant 0 : index
    %4 = vector.load %arg2[%c0_2, %c0_3] : memref<128x128xbf16, #tpu.memory_space<vmem>>, vector<128x128xbf16>
    %cst = arith.constant dense<0.000000e+00> : vector<16x128xf32>
    %5 = tpu.matmul %3, %4, %cst {dimension_numbers = #tpu.dot_dimension_numbers<[1], [0], [0], [1], [0, 0, 1, 1], [], []>} : vector<16x128xbf16>, vector<128x128xbf16>, vector<16x128xf32> -> vector<16x128xf32>
    %c0_4 = arith.constant 0 : index
    %c0_5 = arith.constant 0 : index
    %6 = vector.load %arg3[%c0_4, %c0_5] : memref<1x128xf32, #tpu.memory_space<vmem>>, vector<1x128xf32>
    %7 = vector.broadcast %6 : vector<1x128xf32> to vector<16x128xf32>
    %8 = arith.addf %5, %7 : vector<16x128xf32>
    %c16_i32 = arith.constant 16 : i32
    %9 = arith.muli %arg0, %c16_i32 : i32
    %10 = tpu.iota {dimensions = array<i32: 0>} : vector<16x1xi32>
    %11 = vector.broadcast %9 : i32 to vector<16x1xi32>
    %12 = arith.addi %11, %10 : vector<16x1xi32>
    %c2_i32 = arith.constant 2 : i32
    %13 = vector.broadcast %c2_i32 : i32 to vector<16x1xi32>
    %14 = arith.cmpi slt, %12, %13 : vector<16x1xi32>
    %cst_6 = arith.constant 0.000000e+00 : f32
    %15 = vector.shape_cast %14 : vector<16x1xi1> to vector<16x1xi1>
    %16 = vector.broadcast %15 : vector<16x1xi1> to vector<16x128xi1>
    %17 = vector.broadcast %cst_6 : f32 to vector<16x128xf32>
    %18 = arith.select %16, %8, %17 : vector<16x128xi1>, vector<16x128xf32>
    %cst_7 = arith.constant dense<0.000000e+00> : vector<128xf32>
    %19 = vector.multi_reduction <add>, %18, %cst_7 [0] : vector<16x128xf32> to vector<128xf32>
    %20 = vector.shape_cast %19 : vector<128xf32> to vector<1x128xf32>
    %21 = arith.mulf %18, %18 : vector<16x128xf32>
    %cst_8 = arith.constant dense<0.000000e+00> : vector<128xf32>
    %22 = vector.multi_reduction <add>, %21, %cst_8 [0] : vector<16x128xf32> to vector<128xf32>
    %23 = vector.shape_cast %22 : vector<128xf32> to vector<1x128xf32>
    %c0_9 = arith.constant 0 : index
    %c0_10 = arith.constant 0 : index
    %24 = vector.load %arg4[%c0_9, %c0_10] : memref<2x128xf32, #tpu.memory_space<vmem>>, vector<2x128xf32>
    %25 = tpu.concatenate %20, %23 in 0 : vector<1x128xf32>, vector<1x128xf32> -> vector<2x128xf32>
    %26 = arith.addf %24, %25 : vector<2x128xf32>
    %c0_11 = arith.constant 0 : index
    %c0_12 = arith.constant 0 : index
    %27 = vector.load %arg4[%c0_11, %c0_12] : memref<2x128xf32, #tpu.memory_space<vmem>>, vector<2x128xf32>
    tpu.vector_store %arg4[%c0_11, %c0_12], %26 {strides = array<i32>} : memref<2x128xf32, #tpu.memory_space<vmem>>, vector<2x128xf32>,
    return
  }
  func.func @transform_0(%arg0: i32) -> (i32, i32) {
    %c0_i32 = arith.constant 0 : i32
    %c0_i32_0 = arith.constant 0 : i32
    return %arg0, %c0_i32 : i32, i32
  }
  func.func @transform_1(%arg0: i32) -> (i32, i32) {
    %c0_i32 = arith.constant 0 : i32
    %c0_i32_0 = arith.constant 0 : i32
    %c0_i32_1 = arith.constant 0 : i32
    return %c0_i32, %c0_i32_0 : i32, i32
  }
  func.func @transform_2(%arg0: i32) -> (i32, i32) {
    %c0_i32 = arith.constant 0 : i32
    %c0_i32_0 = arith.constant 0 : i32
    %c0_i32_1 = arith.constant 0 : i32
    return %c0_i32, %c0_i32_0 : i32, i32
  }
  func.func @transform_3(%arg0: i32) -> (i32, i32) {
    %c0_i32 = arith.constant 0 : i32
    %c0_i32_0 = arith.constant 0 : i32
    %c0_i32_1 = arith.constant 0 : i32
    return %c0_i32, %c0_i32_0 : i32, i32
  }
}

</mosaic_0001>

<llo_original>
// kernel: domain_classifier_forward.3
$region0: #{domain_classifier_forward.3}
  #allocation0 [shape = 'u32[]', space=smem, size = 0x4, offset = 0x4, fixed_abs, tag = 'smem constant byte address 0x4 - core index']
  #allocation1 [shape = 'u32[144,128]{1,0:T(1,128)}', space=vmem, size = 0x12000, scoped, tag = 'internal scratch']
  %s0 = inlined_call_operand.vmem [shape: bf16[16,128], index: 0, kind: input, shape index: {}]
  %s1 = inlined_call_operand.vmem [shape: bf16[128,128], index: 1, kind: input, shape index: {}]
  %s2 = inlined_call_operand.vmem [shape: f32[1,128], index: 2, kind: input, shape index: {}]
  %s3 = inlined_call_operand.vmem [shape: f32[1,128], index: 3, kind: input, shape index: {}]
  %s4 = inlined_call_operand.vmem [shape: f32[1,128], index: 4, kind: input, shape index: {}]
  %s5 = inlined_call_operand.vmem [shape: bf16[128,128], index: 5, kind: input, shape index: {}]
  %s6 = inlined_call_operand.vmem [shape: f32[1,128], index: 6, kind: input, shape index: {}]
  %s7 = inlined_call_operand.vmem [shape: f32[16,128], index: 7, kind: output, shape index: {}]
  %s8 = sld [smem:[#allocation0]]
  $region38: #{domain_classifier_forward.3} parent=0
    _
  %s10 = ssub.s32 1, %s8
  %s11 = scalar_select 0, %s10, %s8
  // Predicated region
  $region2: #{domain_classifier_forward.3} parent=0 // pred_check
    _
  $region3: #{domain_classifier_forward.3} parent=0 // pred_check_branch
    %13 = sbr.rel (0) target = $region5
  $region4: #{domain_classifier_forward.3} parent=0 // pred_region
    _
  $region5: #{domain_classifier_forward.3} parent=0 // pred_fallthru
    _
  // Predicated region
  $region6: #{domain_classifier_forward.3} parent=0 // pred_check
    _
  $region7: #{domain_classifier_forward.3} parent=0 // pred_check_branch
    %15 = sbr.rel (0) target = $region9
  $region8: #{domain_classifier_forward.3} parent=0 // pred_region
    _
  $region9: #{domain_classifier_forward.3} parent=0 // pred_fallthru
    _
  // Predicated region
  $region10: #{domain_classifier_forward.3} parent=0 // pred_check
    _
  $region11: #{domain_classifier_forward.3} parent=0 // pred_check_branch
    %17 = sbr.rel (0) target = $region13
  $region12: #{domain_classifier_forward.3} parent=0 // pred_region
    _
  $region13: #{domain_classifier_forward.3} parent=0 // pred_fallthru
    _
  // Predicated region
  $region14: #{domain_classifier_forward.3} parent=0 // pred_check
    _
  $region15: #{domain_classifier_forward.3} parent=0 // pred_check_branch
    %19 = sbr.rel (0) target = $region17
  $region16: #{domain_classifier_forward.3} parent=0 // pred_region
    _
  $region17: #{domain_classifier_forward.3} parent=0 // pred_fallthru
    _
  // Predicated region
  $region18: #{domain_classifier_forward.3} parent=0 // pred_check
    _
  $region19: #{domain_classifier_forward.3} parent=0 // pred_check_branch
    %21 = sbr.rel (0) target = $region21
  $region20: #{domain_classifier_forward.3} parent=0 // pred_region
    _
  $region21: #{domain_classifier_forward.3} parent=0 // pred_fallthru
    _
  // Predicated region
  $region22: #{domain_classifier_forward.3} parent=0 // pred_check
    _
  $region23: #{domain_classifier_forward.3} parent=0 // pred_check_branch
    %23 = sbr.rel (0) target = $region25
  $region24: #{domain_classifier_forward.3} parent=0 // pred_region
    _
  $region25: #{domain_classifier_forward.3} parent=0 // pred_fallthru
    _
  // Predicated region
  $region26: #{domain_classifier_forward.3} parent=0 // pred_check
    _
  $region27: #{domain_classifier_forward.3} parent=0 // pred_check_branch
    %25 = sbr.rel (0) target = $region29
  $region28: #{domain_classifier_forward.3} parent=0 // pred_region
    _
  $region29: #{domain_classifier_forward.3} parent=0 // pred_fallthru
    _
  %v27 = vld [vmem:[%s0] sm:$0xf]
  %v28 = vld [vmem:[%s0 + $0x4] sm:$0xf]
  %v29 = vld [vmem:[%s1] sm:$0xf]
  %v30 = vld [vmem:[%s1 + $0x4] sm:$0xf]
  %v31 = vld [vmem:[%s1 + $0x8] sm:$0xf]
  %v32 = vld [vmem:[%s1 + $0xc] sm:$0xf]
  %v33 = vld [vmem:[%s1 + $0x10] sm:$0xf]
  %v34 = vld [vmem:[%s1 + $0x14] sm:$0xf]
  %v35 = vld [vmem:[%s1 + $0x18] sm:$0xf]
  %v36 = vld [vmem:[%s1 + $0x1c] sm:$0xf]
  %v37 = vld [vmem:[%s1 + $0x20] sm:$0xf]
  %v38 = vld [vmem:[%s1 + $0x24] sm:$0xf]
  %v39 = vld [vmem:[%s1 + $0x28] sm:$0xf]
  %v40 = vld [vmem:[%s1 + $0x2c] sm:$0xf]
  %v41 = vld [vmem:[%s1 + $0x30] sm:$0xf]
  %v42 = vld [vmem:[%s1 + $0x34] sm:$0xf]
  %v43 = vld [vmem:[%s1 + $0x38] sm:$0xf]
  %v44 = vld [vmem:[%s1 + $0x3c] sm:$0xf]
  %v45 = vld [vmem:[%s2] sm:$0x1]
  %v47 = vlaneseq
  %v48 = vshrl.u32 %v47, 7
  %v49 = vsub.s32 0, %v48
  %v50 = vrot.slane %v45, %v49
  %v54 = vunpack.c.l.b16 %v27
  %v55 = vunpack.c.l.b16 %v28
  %v56 = vpack.c.b16 %v55, %v54
  %v74 = vunpack.c.l.b16 %v29
  %v75 = vunpack.c.l.b16 %v30
  %v76 = vunpack.c.l.b16 %v31
  %v77 = vunpack.c.l.b16 %v32
  %v78 = vunpack.c.l.b16 %v33
  %v79 = vunpack.c.l.b16 %v34
  %v80 = vunpack.c.l.b16 %v35
  %v81 = vunpack.c.l.b16 %v36
  %v82 = vunpack.c.l.b16 %v37
  %v83 = vunpack.c.l.b16 %v38
  %v84 = vunpack.c.l.b16 %v39
  %v85 = vunpack.c.l.b16 %v40
  %v86 = vunpack.c.l.b16 %v41
  %v87 = vunpack.c.l.b16 %v42
  %v88 = vunpack.c.l.b16 %v43
  %v89 = vunpack.c.l.b16 %v44
  %v90 = vpack.c.b16 %v75, %v74
  %v91 = vpack.c.b16 %v77, %v76
  %v92 = vpack.c.b16 %v79, %v78
  %v93 = vpack.c.b16 %v81, %v80
  %v94 = vpack.c.b16 %v83, %v82
  %v95 = vpack.c.b16 %v85, %v84
  %v96 = vpack.c.b16 %v87, %v86
  %v97 = vpack.c.b16 %v89, %v88
  %106 = vmatprep.subr.bf16.mxu0 0
  %107 = vmatpush1.bf16.msra.mxu0 %v90
  %108 = vmatprep.subr.bf16.mxu0 0
  %109 = vmatpush1.bf16.msra.mxu0 %v91
  %110 = vmatprep.subr.bf16.mxu0 0
  %111 = vmatpush1.bf16.msra.mxu0 %v92
  %112 = vmatprep.subr.bf16.mxu0 0
  %113 = vmatpush1.bf16.msra.mxu0 %v93
  %114 = vmatprep.subr.bf16.mxu0 0
  %115 = vmatpush1.bf16.msra.mxu0 %v94
  %116 = vmatprep.subr.bf16.mxu0 0
  %117 = vmatpush1.bf16.msra.mxu0 %v95
  %118 = vmatprep.subr.bf16.mxu0 0
  %119 = vmatpush1.bf16.msra.mxu0 %v96
  %120 = vmatprep.subr.bf16.mxu0 0
  %121 = vmatpush1.bf16.msra.mxu0 %v97
  %122 = vmatprep.subr.bf16.mxu0 0
  %123 = vmatpush1.bf16.msra.mxu0 0
  %124 = vmatprep.subr.bf16.mxu0 0
  %125 = vmatpush1.bf16.msra.mxu0 0
  %126 = vmatprep.subr.bf16.mxu0 0
  %127 = vmatpush1.bf16.msra.mxu0 0
  %128 = vmatprep.subr.bf16.mxu0 0
  %129 = vmatpush1.bf16.msra.mxu0 0
  %130 = vmatprep.subr.bf16.mxu0 0
  %131 = vmatpush1.bf16.msra.mxu0 0
  %132 = vmatprep.subr.bf16.mxu0 0
  %133 = vmatpush1.bf16.msra.mxu0 0
  %134 = vmatprep.subr.bf16.mxu0 0
  %135 = vmatpush1.bf16.msra.mxu0 0
  %136 = vmatprep.subr.bf16.mxu0 0
  %137 = vmatpush1.bf16.msra.mxu0 0
  %138 = vmatprep.mubr.bf16.mxu0 0
  %139 = vmatmul.mubr.bf16.gmra.mrb[0].mxu0 %v56
  %v140 = vpop.f32.mrb[0].mxu0
  %v141 = vadd.f32 %v50, %v140
  %v142 = vpop.f32.mrb[0].mxu0
  %v143 = vpop.f32.mrb[0].mxu0
  %v144 = vadd.f32 %v50, %v143
  %v145 = vpop.f32.mrb[0].mxu0
  %146 = vdwg.mxu0
  %v147 = vld [vmem:[%s3] sm:$0x1]
  %v149 = vlaneseq
  %v150 = vshrl.u32 %v149, 7
  %v151 = vsub.s32 0, %v150
  %v152 = vrot.slane %v147, %v151
  %v154 = vmul.f32 %v141, %v152
  %v155 = vmul.f32 %v144, %v152
  %v156 = vld [vmem:[%s4] sm:$0x1]
  %v158 = vlaneseq
  %v159 = vshrl.u32 %v158, 7
  %v160 = vsub.s32 0, %v159
  %v161 = vrot.slane %v156, %v160
  %v163 = vadd.f32 %v154, %v161
  %v164 = vadd.f32 %v155, %v161
  %v165 = vmax.f32 %v163, 0.0
  %v166 = vmax.f32 %v164, 0.0
  %v167 = vpack.c.bf16 %v166, %v165
  %v168 = vld [vmem:[%s5] sm:$0xf]
  %v169 = vld [vmem:[%s5 + $0x4] sm:$0xf]
  %v170 = vld [vmem:[%s5 + $0x8] sm:$0xf]
  %v171 = vld [vmem:[%s5 + $0xc] sm:$0xf]
  %v172 = vld [vmem:[%s5 + $0x10] sm:$0xf]
  %v173 = vld [vmem:[%s5 + $0x14] sm:$0xf]
  %v174 = vld [vmem:[%s5 + $0x18] sm:$0xf]
  %v175 = vld [vmem:[%s5 + $0x1c] sm:$0xf]
  %v176 = vld [vmem:[%s5 + $0x20] sm:$0xf]
  %v177 = vld [vmem:[%s5 + $0x24] sm:$0xf]
  %v178 = vld [vmem:[%s5 + $0x28] sm:$0xf]
  %v179 = vld [vmem:[%s5 + $0x2c] sm:$0xf]
  %v180 = vld [vmem:[%s5 + $0x30] sm:$0xf]
  %v181 = vld [vmem:[%s5 + $0x34] sm:$0xf]
  %v182 = vld [vmem:[%s5 + $0x38] sm:$0xf]
  %v183 = vld [vmem:[%s5 + $0x3c] sm:$0xf]
  %v184 = vld [vmem:[%s6] sm:$0x1]
  %v186 = vlaneseq
  %v187 = vshrl.u32 %v186, 7
  %v188 = vsub.s32 0, %v187
  %v189 = vrot.slane %v184, %v188
  %v207 = vunpack.c.l.b16 %v168
  %v208 = vunpack.c.l.b16 %v169
  %v209 = vunpack.c.l.b16 %v170
  %v210 = vunpack.c.l.b16 %v171
  %v211 = vunpack.c.l.b16 %v172
  %v212 = vunpack.c.l.b16 %v173
  %v213 = vunpack.c.l.b16 %v174
  %v214 = vunpack.c.l.b16 %v175
  %v215 = vunpack.c.l.b16 %v176
  %v216 = vunpack.c.l.b16 %v177
  %v217 = vunpack.c.l.b16 %v178
  %v218 = vunpack.c.l.b16 %v179
  %v219 = vunpack.c.l.b16 %v180
  %v220 = vunpack.c.l.b16 %v181
  %v221 = vunpack.c.l.b16 %v182
  %v222 = vunpack.c.l.b16 %v183
  %v223 = vpack.c.b16 %v208, %v207
  %v224 = vpack.c.b16 %v210, %v209
  %v225 = vpack.c.b16 %v212, %v211
  %v226 = vpack.c.b16 %v214, %v213
  %v227 = vpack.c.b16 %v216, %v215
  %v228 = vpack.c.b16 %v218, %v217
  %v229 = vpack.c.b16 %v220, %v219
  %v230 = vpack.c.b16 %v222, %v221
  %239 = vmatprep.subr.bf16.mxu0 0
  %240 = vmatpush1.bf16.msra.mxu0 %v223
  %241 = vmatprep.subr.bf16.mxu0 0
  %242 = vmatpush1.bf16.msra.mxu0 %v224
  %243 = vmatprep.subr.bf16.mxu0 0
  %244 = vmatpush1.bf16.msra.mxu0 %v225
  %245 = vmatprep.subr.bf16.mxu0 0
  %246 = vmatpush1.bf16.msra.mxu0 %v226
  %247 = vmatprep.subr.bf16.mxu0 0
  %248 = vmatpush1.bf16.msra.mxu0 %v227
  %249 = vmatprep.subr.bf16.mxu0 0
  %250 = vmatpush1.bf16.msra.mxu0 %v228
  %251 = vmatprep.subr.bf16.mxu0 0
  %252 = vmatpush1.bf16.msra.mxu0 %v229
  %253 = vmatprep.subr.bf16.mxu0 0
  %254 = vmatpush1.bf16.msra.mxu0 %v230
  %255 = vmatprep.subr.bf16.mxu0 0
  %256 = vmatpush1.bf16.msra.mxu0 0
  %257 = vmatprep.subr.bf16.mxu0 0
  %258 = vmatpush1.bf16.msra.mxu0 0
  %259 = vmatprep.subr.bf16.mxu0 0
  %260 = vmatpush1.bf16.msra.mxu0 0
  %261 = vmatprep.subr.bf16.mxu0 0
  %262 = vmatpush1.bf16.msra.mxu0 0
  %263 = vmatprep.subr.bf16.mxu0 0
  %264 = vmatpush1.bf16.msra.mxu0 0
  %265 = vmatprep.subr.bf16.mxu0 0
  %266 = vmatpush1.bf16.msra.mxu0 0
  %267 = vmatprep.subr.bf16.mxu0 0
  %268 = vmatpush1.bf16.msra.mxu0 0
  %269 = vmatprep.subr.bf16.mxu0 0
  %270 = vmatpush1.bf16.msra.mxu0 0
  %271 = vmatprep.mubr.bf16.mxu0 0
  %272 = vmatmul.mubr.bf16.gmra.mrb[0].mxu0 %v167
  %v273 = vpop.f32.mrb[0].mxu0
  %v274 = vadd.f32 %v189, %v273
  %v275 = vpop.f32.mrb[0].mxu0
  %v276 = vpop.f32.mrb[0].mxu0
  %v277 = vadd.f32 %v189, %v276
  %v278 = vpop.f32.mrb[0].mxu0
  %279 = vdwg.mxu0
  %280 = vmax.xlane.f32.xlu0 %v274
  %v281 = vpop.xlane.xlu0 %280
  %282 = vmax.xlane.f32.xlu0 %v277
  %v283 = vpop.xlane.xlu0 %282
  %v284 = vsub.f32 %v274, %v281
  %v285 = vsub.f32 %v277, %v283
  %v286 = vmul.f32 %v284, 1.442695
  %v287 = vpow.pop %v286
  %v288 = vmul.f32 %v285, 1.442695
  %v289 = vpow.pop %v288
  %290 = vadd.xlane.f32.xlu0 %v287
  %v291 = vpop.xlane.xlu0 %290
  %292 = vadd.xlane.f32.xlu0 %v289
  %v293 = vpop.xlane.xlu0 %292
  %v294 = vlog2.pop %v291
  %v295 = vmul.f32 %v294, 0.6931472
  %v296 = vlog2.pop %v293
  %v297 = vmul.f32 %v296, 0.6931472
  %v298 = vsub.f32 %v284, %v295
  %v299 = vsub.f32 %v285, %v297
  %300 = vst [vmem:[%s7] sm:$0xff] %v298
  %301 = vst [vmem:[%s7 + $0x8] sm:$0xff] %v299
  // Predicated region
  $region30: #{domain_classifier_forward.3} parent=0 // pred_check
    _
  $region31: #{domain_classifier_forward.3} parent=0 // pred_check_branch
    %303 = sbr.rel (0) target = $region33
  $region32: #{domain_classifier_forward.3} parent=0 // pred_region
    _
  $region33: #{domain_classifier_forward.3} parent=0 // pred_fallthru
    _
  // Predicated region
  $region34: #{domain_classifier_forward.3} parent=0 // pred_check
    _
  $region35: #{domain_classifier_forward.3} parent=0 // pred_check_branch
    %305 = sbr.rel (0) target = $region37
  $region36: #{domain_classifier_forward.3} parent=0 // pred_region
    _
  $region37: #{domain_classifier_forward.3} parent=0 // pred_fallthru
    _

// kernel: domain_classifier_forward.2
$region0: #{domain_classifier_forward.2}
  #allocation0 [shape = 'u32[]', space=smem, size = 0x4, offset = 0x4, fixed_abs, tag = 'smem constant byte address 0x4 - core index']
  #allocation1 [shape = 'u32[144,128]{1,0:T(1,128)}', space=vmem, size = 0x12000, scoped, tag = 'internal scratch']
  %s0 = inlined_call_operand.vmem [shape: bf16[16,128], index: 0, kind: input, shape index: {}]
  %s1 = inlined_call_operand.vmem [shape: bf16[128,128], index: 1, kind: input, shape index: {}]
  %s2 = inlined_call_operand.vmem [shape: f32[1,128], index: 2, kind: input, shape index: {}]
  %s3 = inlined_call_operand.vmem [shape: f32[2,128], index: 3, kind: output, shape index: {}]
  %s4 = sld [smem:[#allocation0]]
  $region26: #{domain_classifier_forward.2} parent=0
    _
  %s6 = ssub.s32 1, %s4
  %s7 = scalar_select 0, %s6, %s4
  // Predicated region
  $region2: #{domain_classifier_forward.2} parent=0 // pred_check
    _
  $region3: #{domain_classifier_forward.2} parent=0 // pred_check_branch
    %9 = sbr.rel (0) target = $region5
  $region4: #{domain_classifier_forward.2} parent=0 // pred_region
    _
  $region5: #{domain_classifier_forward.2} parent=0 // pred_fallthru
    _
  // Predicated region
  $region6: #{domain_classifier_forward.2} parent=0 // pred_check
    _
  $region7: #{domain_classifier_forward.2} parent=0 // pred_check_branch
    %11 = sbr.rel (0) target = $region9
  $region8: #{domain_classifier_forward.2} parent=0 // pred_region
    _
  $region9: #{domain_classifier_forward.2} parent=0 // pred_fallthru
    _
  // Predicated region
  $region10: #{domain_classifier_forward.2} parent=0 // pred_check
    _
  $region11: #{domain_classifier_forward.2} parent=0 // pred_check_branch
    %13 = sbr.rel (0) target = $region13
  $region12: #{domain_classifier_forward.2} parent=0 // pred_region
    _
  $region13: #{domain_classifier_forward.2} parent=0 // pred_fallthru
    _
  %p15 = scmp.eq.s32.totalorder 0, 0
  // Predicated region
  $region14: #{domain_classifier_forward.2} parent=0 // pred_check
    %p16 = pneg %p15
  $region15: #{domain_classifier_forward.2} parent=0 // pred_check_branch
    %18 = sbr.rel (%p16) target = $region17
  $region16: #{domain_classifier_forward.2} parent=0 // pred_region
    %19 = vst [vmem:[%s3] sm:$0x3] 0.0
  $region17: #{domain_classifier_forward.2} parent=0 // pred_fallthru
    _
  %v20 = vld [vmem:[%s0] sm:$0xf]
  %v21 = vld [vmem:[%s0 + $0x4] sm:$0xf]
  %v22 = vld [vmem:[%s1] sm:$0xf]
  %v23 = vld [vmem:[%s1 + $0x4] sm:$0xf]
  %v24 = vld [vmem:[%s1 + $0x8] sm:$0xf]
  %v25 = vld [vmem:[%s1 + $0xc] sm:$0xf]
  %v26 = vld [vmem:[%s1 + $0x10] sm:$0xf]
  %v27 = vld [vmem:[%s1 + $0x14] sm:$0xf]
  %v28 = vld [vmem:[%s1 + $0x18] sm:$0xf]
  %v29 = vld [vmem:[%s1 + $0x1c] sm:$0xf]
  %v30 = vld [vmem:[%s1 + $0x20] sm:$0xf]
  %v31 = vld [vmem:[%s1 + $0x24] sm:$0xf]
  %v32 = vld [vmem:[%s1 + $0x28] sm:$0xf]
  %v33 = vld [vmem:[%s1 + $0x2c] sm:$0xf]
  %v34 = vld [vmem:[%s1 + $0x30] sm:$0xf]
  %v35 = vld [vmem:[%s1 + $0x34] sm:$0xf]
  %v36 = vld [vmem:[%s1 + $0x38] sm:$0xf]
  %v37 = vld [vmem:[%s1 + $0x3c] sm:$0xf]
  %v38 = vld [vmem:[%s2] sm:$0x1]
  %v40 = vlaneseq
  %v41 = vshrl.u32 %v40, 7
  %v42 = vsub.s32 0, %v41
  %v43 = vrot.slane %v38, %v42
  %v47 = vunpack.c.l.b16 %v20
  %v48 = vunpack.c.l.b16 %v21
  %v49 = vpack.c.b16 %v48, %v47
  %v67 = vunpack.c.l.b16 %v22
  %v68 = vunpack.c.l.b16 %v23
  %v69 = vunpack.c.l.b16 %v24
  %v70 = vunpack.c.l.b16 %v25
  %v71 = vunpack.c.l.b16 %v26
  %v72 = vunpack.c.l.b16 %v27
  %v73 = vunpack.c.l.b16 %v28
  %v74 = vunpack.c.l.b16 %v29
  %v75 = vunpack.c.l.b16 %v30
  %v76 = vunpack.c.l.b16 %v31
  %v77 = vunpack.c.l.b16 %v32
  %v78 = vunpack.c.l.b16 %v33
  %v79 = vunpack.c.l.b16 %v34
  %v80 = vunpack.c.l.b16 %v35
  %v81 = vunpack.c.l.b16 %v36
  %v82 = vunpack.c.l.b16 %v37
  %v83 = vpack.c.b16 %v68, %v67
  %v84 = vpack.c.b16 %v70, %v69
  %v85 = vpack.c.b16 %v72, %v71
  %v86 = vpack.c.b16 %v74, %v73
  %v87 = vpack.c.b16 %v76, %v75
  %v88 = vpack.c.b16 %v78, %v77
  %v89 = vpack.c.b16 %v80, %v79
  %v90 = vpack.c.b16 %v82, %v81
  %99 = vmatprep.subr.bf16.mxu0 0
  %100 = vmatpush1.bf16.msra.mxu0 %v83
  %101 = vmatprep.subr.bf16.mxu0 0
  %102 = vmatpush1.bf16.msra.mxu0 %v84
  %103 = vmatprep.subr.bf16.mxu0 0
  %104 = vmatpush1.bf16.msra.mxu0 %v85
  %105 = vmatprep.subr.bf16.mxu0 0
  %106 = vmatpush1.bf16.msra.mxu0 %v86
  %107 = vmatprep.subr.bf16.mxu0 0
  %108 = vmatpush1.bf16.msra.mxu0 %v87
  %109 = vmatprep.subr.bf16.mxu0 0
  %110 = vmatpush1.bf16.msra.mxu0 %v88
  %111 = vmatprep.subr.bf16.mxu0 0
  %112 = vmatpush1.bf16.msra.mxu0 %v89
  %113 = vmatprep.subr.bf16.mxu0 0
  %114 = vmatpush1.bf16.msra.mxu0 %v90
  %115 = vmatprep.subr.bf16.mxu0 0
  %116 = vmatpush1.bf16.msra.mxu0 0
  %117 = vmatprep.subr.bf16.mxu0 0
  %118 = vmatpush1.bf16.msra.mxu0 0
  %119 = vmatprep.subr.bf16.mxu0 0
  %120 = vmatpush1.bf16.msra.mxu0 0
  %121 = vmatprep.subr.bf16.mxu0 0
  %122 = vmatpush1.bf16.msra.mxu0 0
  %123 = vmatprep.subr.bf16.mxu0 0
  %124 = vmatpush1.bf16.msra.mxu0 0
  %125 = vmatprep.subr.bf16.mxu0 0
  %126 = vmatpush1.bf16.msra.mxu0 0
  %127 = vmatprep.subr.bf16.mxu0 0
  %128 = vmatpush1.bf16.msra.mxu0 0
  %129 = vmatprep.subr.bf16.mxu0 0
  %130 = vmatpush1.bf16.msra.mxu0 0
  %131 = vmatprep.mubr.bf16.mxu0 0
  %132 = vmatmul.mubr.bf16.gmra.mrb[0].mxu0 %v49
  %v133 = vpop.f32.mrb[0].mxu0
  %v134 = vadd.f32 %v43, %v133
  %v135 = vpop.f32.mrb[0].mxu0
  %v136 = vpop.f32.mrb[0].mxu0
  %v137 = vadd.f32 %v43, %v136
  %v138 = vpop.f32.mrb[0].mxu0
  %139 = vdwg.mxu0
  %s140 = smul.u32 0, 16
  %v141 = vlaneseq
  %v142 = vshrl.u32 %v141, 7
  %v143 = vadd.s32 %v142, 8
  %v144 = vstv %s140
  %v145 = vadd.s32 %v144, %v142
  %v146 = vadd.s32 %v144, %v143
  %vm147 = vcmp.lt.s32.totalorder %v145, 2
  %vm148 = vcmp.lt.s32.totalorder %v146, 2
  %v149 = vsel %vm147, 1, 0
  %v150 = vsel %vm148, 1, 0
  %vm151 = vcmp.eq.s32.totalorder %v149, 1
  %vm152 = vcmp.eq.s32.totalorder %v150, 1
  %v153 = vsel %vm151, %v134, 0.0
  %v154 = vsel %vm152, %v137, 0.0
  %v155 = vadd.f32 %v153, %v154
  %v156 = vrot.slane %v155, 4
  %v157 = vadd.f32 %v155, %v156
  %v158 = vrot.slane %v157, 2
  %v159 = vadd.f32 %v157, %v158
  %v160 = vrot.slane %v159, 1
  %v161 = vadd.f32 %v159, %v160
  %v162 = vmul.f32 %v153, %v153
  %v163 = vmul.f32 %v154, %v154
  %v164 = vadd.f32 %v162, %v163
  %v165 = vrot.slane %v164, 4
  %v166 = vadd.f32 %v164, %v165
  %v167 = vrot.slane %v166, 2
  %v168 = vadd.f32 %v166, %v167
  %v169 = vrot.slane %v168, 1
  %v170 = vadd.f32 %v168, %v169
  %v171 = vld [vmem:[%s3] sm:$0x3]
  %vm172 = vcmask 1040384
  %v173 = vsel %vm172, %v161, %v170
  %v174 = vadd.f32 %v171, %v173
  %175 = vst [vmem:[%s3] sm:$0x3] %v174
  // Predicated region
  $region18: #{domain_classifier_forward.2} parent=0 // pred_check
    _
  $region19: #{domain_classifier_forward.2} parent=0 // pred_check_branch
    %177 = sbr.rel (0) target = $region21
  $region20: #{domain_classifier_forward.2} parent=0 // pred_region
    _
  $region21: #{domain_classifier_forward.2} parent=0 // pred_fallthru
    _
  // Predicated region
  $region22: #{domain_classifier_forward.2} parent=0 // pred_check
    _
  $region23: #{domain_classifier_forward.2} parent=0 // pred_check_branch
    %179 = sbr.rel (0) target = $region25
  $region24: #{domain_classifier_forward.2} parent=0 // pred_region
    _
  $region25: #{domain_classifier_forward.2} parent=0 // pred_fallthru
    _

</llo_original>
